<compile_context>
chip_gen: v5e
topology: v5e:2x2
jax: 0.10.0
libtpu: 0.0.40
codegen_flags: <defaults>
</compile_context>

<pallas_src>
import functools

import numpy as np
import jax
import jax.numpy as jnp
from jax.experimental import pallas as pl
from jax.experimental.pallas import tpu as pltpu


_NEG_LARGE = -3.0e38  # stand-in for torch's -inf masked_fill; ReLU clamps it to 0 anyway


def _relu_kernel(x_ref, out_ref):
    """'none' pooling: identity + ReLU (dropout is identity in eval mode)."""
    out_ref[...] = jnp.maximum(x_ref[...], 0.0).astype(out_ref.dtype)


def _cls_kernel(x_ref, out_ref):
    """'cls' pooling: x_ref is [TB, ts, H] (only a small seq prefix is DMA'd)."""
    out_ref[...] = jnp.maximum(x_ref[:, 0, :], 0.0).astype(out_ref.dtype)


def _masked_pool_kernel(x_ref, mask_ref, out_ref, *, pooling):
    """x_ref: [TB, S, H] last_hidden_state tile; mask_ref: [TB, S] {0,1} f32."""
    x = x_ref[...]
    m = mask_ref[...]                                    # [TB, S]
    m3 = m[:, :, None]                                   # [TB, S, 1]

    if pooling == "sum":
        v = jnp.sum(x * m3, axis=1)
    elif pooling == "mean":
        s = jnp.sum(x * m3, axis=1)                      # [TB, H]
        cnt = jnp.sum(m, axis=1, keepdims=True)          # [TB, 1]
        cnt = jnp.where(cnt == 0.0, 1.0, cnt)            # torch: masked_fill(cnt==0, 1)
        v = s * pl.reciprocal(cnt, approx=False)
    elif pooling == "max":
        v = jnp.max(jnp.where(m3 > 0.0, x, _NEG_LARGE), axis=1)
    else:
        raise ValueError(f"unknown pooling: {pooling}")

    # ReLU activation; Dropout(0.2) is identity in eval mode.
    # TODO(synk): training-mode dropout (pltpu.prng_*) not implemented.
    out_ref[...] = jnp.maximum(v, 0.0).astype(out_ref.dtype)


def _pick_tile_b(B, per_item_bytes, budget_bytes=4 * 1024 * 1024):
    """Largest divisor of B whose x-tile stays within a per-buffer VMEM budget."""
    best = 1
    for tb in range(1, B + 1):
        if B % tb == 0 and tb * per_item_bytes <= budget_bytes:
            best = tb
    return best


def textbert_head_forward(last_hidden_state, attention_mask, pooling="cls"):
    """Pallas wrapper: masked pooling + ReLU over the transformer output.

    last_hidden_state: [B, S, H] float32
    attention_mask   : [B, S]    int/bool (1 = valid token)
    returns          : [B, H] (or [B, S, H] for pooling='none')
    """
    B, S, H = last_hidden_state.shape
    itemsize = jnp.dtype(last_hidden_state.dtype).itemsize

    # Seq extent actually transferred per block ('cls' only needs the first rows).
    if pooling == "cls":
        seq_block = S if S < 8 else 8          # sublane-aligned prefix containing CLS
    else:
        seq_block = S

    tile_b = _pick_tile_b(B, seq_block * H * itemsize)
    grid = (B // tile_b,)

    compiler_params = pltpu.CompilerParams(
        dimension_semantics=("parallel",),     # shard batch tiles across TCs (v7x)
        vmem_limit_bytes=32 * 1024 * 1024,     # explicit, safe on v5e/v6e/v7x
    )

    if pooling == "none":
        return pl.pallas_call(
            _relu_kernel,
            out_shape=jax.ShapeDtypeStruct((B, S, H), last_hidden_state.dtype),
            grid=grid,
            in_specs=[pl.BlockSpec((tile_b, S, H), lambda i: (i, 0, 0))],
            out_specs=pl.BlockSpec((tile_b, S, H), lambda i: (i, 0, 0)),
            compiler_params=compiler_params,
        )(last_hidden_state)

    out_shape = jax.ShapeDtypeStruct((B, H), last_hidden_state.dtype)
    out_spec = pl.BlockSpec((tile_b, H), lambda i: (i, 0))

    if pooling == "cls":
        # Only DMA the first `seq_block` seq positions (contains the CLS token).
        return pl.pallas_call(
            _cls_kernel,
            out_shape=out_shape,
            grid=grid,
            in_specs=[pl.BlockSpec((tile_b, seq_block, H), lambda i: (i, 0, 0))],
            out_specs=out_spec,
            compiler_params=compiler_params,
        )(last_hidden_state)

    if pooling not in ("mean", "max", "sum"):
        raise ValueError(f"unknown pooling: {pooling}")

    mask_f = attention_mask.astype(jnp.float32)
    kernel = functools.partial(_masked_pool_kernel, pooling=pooling)
    return pl.pallas_call(
        kernel,
        out_shape=out_shape,
        grid=grid,
        in_specs=[
            pl.BlockSpec((tile_b, S, H), lambda i: (i, 0, 0)),  # hidden states tile
            pl.BlockSpec((tile_b, S), lambda i: (i, 0)),        # attention mask tile
        ],
        out_specs=out_spec,
        compiler_params=compiler_params,
    )(last_hidden_state, mask_f)


def reference_forward(last_hidden_state, attention_mask, pooling="cls"):
    """Pure-JAX reference matching the PyTorch module (eval mode)."""
    x = last_hidden_state
    maskb = attention_mask.astype(bool)[..., None]  # [B, S, 1]
    if pooling == "cls":
        v = x[..., 0, :]
    elif pooling == "mean":
        xm = jnp.where(maskb, x, 0.0)
        cnt = jnp.sum(maskb, axis=-2).astype(x.dtype)
        cnt = jnp.where(cnt == 0, 1, cnt)
        v = jnp.sum(xm, axis=-2) / cnt
    elif pooling == "max":
        xm = jnp.where(maskb, x, -jnp.inf)
        v = jnp.max(xm, axis=-2)
    elif pooling == "sum":
        xm = jnp.where(maskb, x, 0.0)
        v = jnp.sum(xm, axis=-2)
    elif pooling == "none":
        v = x
    else:
        raise ValueError(pooling)
    return jax.nn.relu(v)  # dropout is identity in eval mode


if __name__ == "__main__":
    # Small shapes consistent with the module: batch=8, seq=16, hidden=128
    # (hidden kept a multiple of 128 for lane-dense vregs/stores).
    B, S, H = 8, 16, 128

    key = jax.random.PRNGKey(0)
    k1, k2 = jax.random.split(key)

    # Stand-in for the transformer's last_hidden_state (backbone not translatable).
    hidden = jax.random.normal(k1, (B, S, H), jnp.float32)

    # Attention mask with trailing padding per row (at least 1 valid token each).
    lens = jax.random.randint(k2, (B,), 1, S + 1)
    attention_mask = (jnp.arange(S)[None, :] < lens[:, None]).astype(jnp.int32)

    # Default pooling is 'cls'; also exercise the masked poolers and identity.
    for pooling in ("cls", "mean", "max", "sum", "none"):
        out = jax.block_until_ready(textbert_head_forward(hidden, attention_mask, pooling))
        ref = reference_forward(hidden, attention_mask, pooling)
        np.testing.assert_allclose(np.asarray(out), np.asarray(ref), rtol=1e-5, atol=1e-5)

    print("KERNEL_OK")
</pallas_src>

<mosaic_0001>
module attributes {stable_mosaic.version = 11 : i64} {
  func.func @_cls_kernel(%arg0: i32, %arg1: memref<8x8x128xf32, #tpu.memory_space<vmem>>, %arg2: memref<8x128xf32, #tpu.memory_space<vmem>>) attributes {dimension_semantics = [#tpu.dimension_semantics<parallel>], iteration_bounds = array<i64: 1>, scalar_prefetch = 0 : i64, scratch_operands = 0 : i64, tpu.core_type = #tpu.core_type<tc>, window_params = [{transform_indices = @transform_0, window_bounds = array<i64: 8, 8, 128>}, {transform_indices = @transform_1, window_bounds = array<i64: 8, 128>}]} {
    %c0 = arith.constant 0 : index
    %c0_0 = arith.constant 0 : index
    %c0_1 = arith.constant 0 : index
    %0 = vector.load %arg1[%c0, %c0_0, %c0_1] : memref<8x8x128xf32, #tpu.memory_space<vmem>>, vector<8x1x128xf32>
    %1 = vector.shape_cast %0 : vector<8x1x128xf32> to vector<8x128xf32>
    %cst = arith.constant 0.000000e+00 : f32
    %2 = vector.broadcast %cst : f32 to vector<8x128xf32>
    %3 = arith.maximumf %1, %2 : vector<8x128xf32>
    %c0_2 = arith.constant 0 : index
    %c0_3 = arith.constant 0 : index
    %4 = vector.load %arg2[%c0_2, %c0_3] : memref<8x128xf32, #tpu.memory_space<vmem>>, vector<8x128xf32>
    tpu.vector_store %arg2[%c0_2, %c0_3], %3 {strides = array<i32>} : memref<8x128xf32, #tpu.memory_space<vmem>>, vector<8x128xf32>,
    return
  }
  func.func @transform_0(%arg0: i32) -> (i32, i32, i32) {
    %c0_i32 = arith.constant 0 : i32
    %c0_i32_0 = arith.constant 0 : i32
    %c0_i32_1 = arith.constant 0 : i32
    return %arg0, %c0_i32, %c0_i32_0 : i32, i32, i32
  }
  func.func @transform_1(%arg0: i32) -> (i32, i32) {
    %c0_i32 = arith.constant 0 : i32
    %c0_i32_0 = arith.constant 0 : i32
    return %arg0, %c0_i32 : i32, i32
  }
}

</mosaic_0001>

<llo_original>
// kernel: tpu_custom_call.1
$region0: #{tpu_custom_call.1}
  #allocation0 [shape = 'u32[]', space=smem, size = 0x4, offset = 0x4, fixed_abs, tag = 'smem constant byte address 0x4 - core index']
  #allocation1 [shape = 'u32[72,128]{1,0:T(1,128)}', space=vmem, size = 0x9000, scoped, tag = 'internal scratch']
  %s0 = inlined_call_operand.hbm [shape: f32[8,16,128], index: 0, kind: input, shape index: {}]
  %s1 = inlined_call_operand.hbm [shape: f32[8,128], index: 1, kind: output, shape index: {}]
  %s2 = sld [smem:[#allocation0]]
  $region18: #{tpu_custom_call.1} parent=0
    _
  %s4 = ssub.s32 1, %s2
  %s5 = scalar_select 0, %s4, %s2
  $region1: #{tpu_custom_call.1} parent=0
    #allocation2 [shape = 'u8[32768]{0}', space=vmem, size = 0x8000, scoped, tag = 'input window, operand 0, single buffered']
    #allocation3 [shape = 's32[1]{0}', space=sflag, size = 0x4, scoped, tag = 'scoped memory for tpu_custom_call.1']
    #allocation4 [shape = 's32[1]{0}', space=sflag, size = 0x4, scoped, tag = 'scoped memory for tpu_custom_call.1']
    #allocation5 [shape = 'u8[4096]{0}', space=vmem, size = 0x1000, scoped, tag = 'output window, operand 0, single buffered']
    %6 = vsyncpa [#allocation3], 0
    %7 = vsyncpa [#allocation4], 0
    // Predicated region
    $region2: #{tpu_custom_call.1} parent=1 // pred_check
      _
    $region3: #{tpu_custom_call.1} parent=1 // pred_check_branch
      %9 = sbr.rel (0) target = $region5
    $region4: #{tpu_custom_call.1} parent=1 // pred_region
      %11 = vsyncadd [#allocation3], 0
      %s12 = sshll.u32 %s0, 4
      %s13 = int_to_ptr.hbm [resolvable:$true] %s12
      %s14 = sshll.u32 [#allocation2], 4
      %s15 = int_to_ptr.vmem [resolvable:$true] %s14
      %20 = dma.hbm_to_vmem [thread:$0]  %s13, 1024, %s15, [#allocation3], 256, 128, 8
    $region5: #{tpu_custom_call.1} parent=1 // pred_fallthru
      _
    // Predicated region
    $region6: #{tpu_custom_call.1} parent=1 // pred_check
      _
    $region7: #{tpu_custom_call.1} parent=1 // pred_check_branch
      %22 = sbr.rel (0) target = $region9
    $region8: #{tpu_custom_call.1} parent=1 // pred_region
      %24 = dma.done [#allocation3], 1024
    $region9: #{tpu_custom_call.1} parent=1 // pred_fallthru
      _
    %v25 = vld [vmem:[#allocation2] sm:$0x1]
    %v26 = vld [vmem:[#allocation2 + $0x8] sm:$0x1]
    %v27 = vld [vmem:[#allocation2 + $0x10] sm:$0x1]
    %v28 = vld [vmem:[#allocation2 + $0x18] sm:$0x1]
    %v29 = vld [vmem:[#allocation2 + $0x20] sm:$0x1]
    %v30 = vld [vmem:[#allocation2 + $0x28] sm:$0x1]
    %v31 = vld [vmem:[#allocation2 + $0x30] sm:$0x1]
    %v32 = vld [vmem:[#allocation2 + $0x38] sm:$0x1]
    %v33 = vmax.f32 %v25, 0.0
    %v34 = vmax.f32 %v26, 0.0
    %v35 = vmax.f32 %v27, 0.0
    %v36 = vmax.f32 %v28, 0.0
    %v37 = vmax.f32 %v29, 0.0
    %v38 = vmax.f32 %v30, 0.0
    %v39 = vmax.f32 %v31, 0.0
    %v40 = vmax.f32 %v32, 0.0
    %v49 = vrot.slane %v34, 7
    %vm50 = vcmask 1041409
    %v51 = vsel %vm50, %v49, %v33
    %v52 = vrot.slane %v35, 6
    %vm53 = vcmask 1042434
    %v54 = vsel %vm53, %v52, %v51
    %v55 = vrot.slane %v36, 5
    %vm56 = vcmask 1043459
    %v57 = vsel %vm56, %v55, %v54
    %v58 = vrot.slane %v37, 4
    %vm59 = vcmask 1044484
    %v60 = vsel %vm59, %v58, %v57
    %v61 = vrot.slane %v38, 3
    %vm62 = vcmask 1045509
    %v63 = vsel %vm62, %v61, %v60
    %v64 = vrot.slane %v39, 2
    %vm65 = vcmask 1046534
    %v66 = vsel %vm65, %v64, %v63
    %v67 = vrot.slane %v40, 1
    %vm68 = vcmask 1047559
    %v69 = vsel %vm68, %v67, %v66
    %71 = vst [vmem:[#allocation5] sm:$0xff] %v69
    // Predicated region
    $region10: #{tpu_custom_call.1} parent=1 // pred_check
      _
    $region11: #{tpu_custom_call.1} parent=1 // pred_check_branch
      %73 = sbr.rel (0) target = $region13
    $region12: #{tpu_custom_call.1} parent=1 // pred_region
      %75 = vsyncadd [#allocation4], 0
      %s77 = sshll.u32 [#allocation5], 4
      %s78 = int_to_ptr.vmem [resolvable:$true] %s77
      %s79 = sshll.u32 %s1, 4
      %s80 = int_to_ptr.hbm [resolvable:$true] %s79
      %82 = dma.vmem_to_hbm [thread:$0]  %s78, 128, %s80, [#allocation4]
    $region13: #{tpu_custom_call.1} parent=1 // pred_fallthru
      _
    // Predicated region
    $region14: #{tpu_custom_call.1} parent=1 // pred_check
      _
    $region15: #{tpu_custom_call.1} parent=1 // pred_check_branch
      %84 = sbr.rel (0) target = $region17
    $region16: #{tpu_custom_call.1} parent=1 // pred_region
      %86 = dma.done [#allocation4], 128
    $region17: #{tpu_custom_call.1} parent=1 // pred_fallthru
      _
    %87 = vsyncpa [#allocation3], 1
    %88 = vsyncpa [#allocation4], 1

</llo_original>
